<compile_context>
chip_gen: v6e
topology: v6e:2x2x1
jax: 0.10.0
libtpu: 0.0.40
codegen_flags: <defaults>
</compile_context>

<pallas_src>
import jax
import jax.numpy as jnp
from jax import lax
from jax.experimental import pallas as pl
from jax.experimental.pallas import tpu as pltpu

_LANES = 128

_PLAIN = ("input_ub", "input_lb", "W_upper", "W_lower",
          "b_upper", "b_lower", "ub", "lb")
_CLONED = ("W_upper", "W_lower", "b_upper", "b_lower")

_VMEM_BUDGET = 40 << 20      # total double-buffered VMEM budget (v7x-safe)
_MAX_BLOCK_BYTES = 1 << 20   # per-ref block cap
_MIN_GRID_STEPS = 4          # so read / write DMA streams pipeline


def _packing(dtype) -> int:
    """Sublane packing factor: 1 for f32, 2 for bf16, 4 for int8/fp8."""
    return max(1, 4 // jnp.dtype(dtype).itemsize)


def _make_copy_kernel(n_in, out_src, block_rows, sub_rows):
    """Fused copy kernel: refs = in_refs + out_refs; out_src[j] = index of the
    input feeding output j.  Each input chunk is loaded once and stored to
    every output that needs it (1 read / 2 writes for the clone pairs)."""
    dsts = [[] for _ in range(n_in)]
    for j, s in enumerate(out_src):
        dsts[s].append(j)
    n_full, rem = divmod(block_rows, sub_rows)

    def kernel(*refs):
        in_refs = refs[:n_in]
        out_refs = refs[n_in:]

        def copy_chunk(r0, nrows):
            # <= 32 KiB live at a time -> no risk of spilling the vreg file.
            for i in range(n_in):
                v = in_refs[i][pl.ds(r0, nrows), :]
                for j in dsts[i]:
                    out_refs[j][pl.ds(r0, nrows), :] = v

        if n_full > 0:
            def body(c, carry):
                r = pl.multiple_of(c * sub_rows, sub_rows)
                copy_chunk(r, sub_rows)
                return carry
            lax.fori_loop(0, n_full, body, 0, unroll=False)
        if rem > 0:
            copy_chunk(n_full * sub_rows, rem)

    return kernel


def fused_flatten_copy(tensors, out_src):
    """Flatten every tensor in `tensors` (same element count and dtype) and
    produce len(out_src) 1-D copies in a SINGLE pallas_call; out_src[j] is the
    index of the input feeding output j."""
    n_in = len(tensors)
    n_out = len(out_src)
    n_refs = n_in + n_out
    dtype = tensors[0].dtype
    n = int(tensors[0].size)
    assert all(int(t.size) == n and t.dtype == dtype for t in tensors)

    itemsize = jnp.dtype(dtype).itemsize
    pack = _packing(dtype)
    tile_rows = 8 * pack           # minimal native tile rows for this dtype
    sub_rows = 8 * tile_rows       # 32 KiB in-kernel chunk regardless of dtype
    row_bytes = _LANES * itemsize

    # Flatten: metadata-only on contiguous arrays (no HBM pass).
    flats = [t.reshape(-1) for t in tensors]
    n_pad = ((n + _LANES - 1) // _LANES) * _LANES
    if n_pad != n:
        # Non-lane-aligned tail (< 128 elements).  Only the tensors actually
        # routed through the kernel are padded (4 of them in the default
        # clone-only mode).  The demo / common CHW sizes never hit this path.
        # TODO(synk): handle the tail with an in-kernel masked last block so
        # the unaligned case is single-pass as well.
        flats = [jnp.pad(f, (0, n_pad - n)) for f in flats]
    rows = n_pad // _LANES
    x2d = [f.reshape(rows, _LANES) for f in flats]

    # Block sizing: big enough to amortize ~0.35us/step against HBM BW, small
    # enough that (2 buffers * n_refs * block) fits the VMEM budget, and split
    # into >= _MIN_GRID_STEPS so input/output DMA streams overlap.
    cap_bytes = min(_MAX_BLOCK_BYTES, _VMEM_BUDGET // (2 * n_refs))
    cap_rows = max(sub_rows, (cap_bytes // row_bytes) // sub_rows * sub_rows)
    if rows <= 2 * sub_rows:
        block_rows = rows                           # tiny tensor: one block
    else:
        want = -(-rows // _MIN_GRID_STEPS)          # cdiv(rows, 4)
        want = -(-want // sub_rows) * sub_rows      # round up to sub_rows
        block_rows = min(cap_rows, want)
    grid = (pl.cdiv(rows, block_rows),)

    spec = pl.BlockSpec((block_rows, _LANES), lambda i: (i, 0))
    block_bytes = block_rows * row_bytes
    vmem_limit = min(48 << 20, 2 * n_refs * block_bytes + (8 << 20))
    total_bytes = n_refs * rows * row_bytes

    outs2d = pl.pallas_call(
        _make_copy_kernel(n_in, tuple(out_src), block_rows,
                          min(sub_rows, block_rows)),
        out_shape=tuple(jax.ShapeDtypeStruct((rows, _LANES), dtype)
                        for _ in range(n_out)),
        grid_spec=pltpu.PrefetchScalarGridSpec(
            num_scalar_prefetch=0,
            grid=grid,
            in_specs=[spec] * n_in,
            out_specs=[spec] * n_out,
        ),
        compiler_params=pltpu.CompilerParams(
            dimension_semantics=("parallel",),
            vmem_limit_bytes=int(vmem_limit)),
        cost_estimate=pl.CostEstimate(flops=0, transcendentals=0,
                                      bytes_accessed=int(total_bytes)),
    )(*x2d)

    outs = [o.reshape(-1) for o in outs2d]
    if n_pad != n:
        outs = [o[:n] for o in outs]
    return outs


def abstract_flatten_forward(prev_layer: dict,
                             copy_plain_flattens: bool = False) -> dict:
    """Pallas equivalent of AbstractFlatten.forward.

    copy_plain_flattens=False (default): plain flattens are metadata-only
        reshapes (torch.flatten() is a view); only the four .clone()s run
        through the fused Pallas copy kernel.
    copy_plain_flattens=True: every output (flattens and clones) is produced
        by one fused Pallas copy per (size, dtype) group.
    """
    # NOTE: the PyTorch forward starts with `assert False`; we implement the
    # intended semantics (flatten everything, clone the *2 coefficients).
    out = {"prev": None}

    # Group tensors by (element count, dtype): one fused pallas_call per group.
    groups = {}
    for name in _PLAIN:
        t = prev_layer[name]
        groups.setdefault((int(t.size), jnp.dtype(t.dtype)), []).append(name)

    for _, names in groups.items():
        if copy_plain_flattens:
            in_names = list(names)
        else:
            in_names = [nm for nm in names if nm in _CLONED]
            for nm in names:
                out[nm] = prev_layer[nm].reshape(-1)   # view-style flatten
        if not in_names:
            continue

        out_names, out_src = [], []
        for i, nm in enumerate(in_names):
            if copy_plain_flattens:
                out_names.append(nm)
                out_src.append(i)
            if nm in _CLONED:
                out_names.append(nm + "2")
                out_src.append(i)

        results = fused_flatten_copy([prev_layer[nm] for nm in in_names],
                                     out_src)
        for nm, r in zip(out_names, results):
            out[nm] = r

    out["n_out"] = int(out["input_ub"].shape[0])
    return out


if __name__ == "__main__":
    key = jax.random.PRNGKey(0)
    C, H, W = 4, 16, 16          # small CHW input; n = 1024 flattened

    names = list(_PLAIN)
    keys = jax.random.split(key, len(names))
    prev_layer = {
        name: jax.random.normal(k, (C, H, W), dtype=jnp.float32)
        for name, k in zip(names, keys)
    }
    # Make bounds ordered (lb <= ub) for plausibility; not required by flatten.
    prev_layer["input_lb"] = jnp.minimum(prev_layer["input_lb"],
                                         prev_layer["input_ub"])
    prev_layer["lb"] = jnp.minimum(prev_layer["lb"], prev_layer["ub"])

    n = C * H * W

    # Default path: clone-only fused Pallas copy (4 inputs -> 4 clones).
    out = abstract_flatten_forward(prev_layer)
    jax.block_until_ready(out["W_upper2"])
    for nm in names:
        ref = prev_layer[nm].reshape(-1)
        got = out[nm]
        assert got.shape == (n,), got.shape
        assert got.dtype == ref.dtype
        assert bool(jnp.all(got == ref))
    for nm in _CLONED:
        assert bool(jnp.all(out[nm + "2"] == out[nm]))
    assert out["n_out"] == n

    # Fully-materializing path: one fused 8-in / 12-out Pallas launch.
    out2 = abstract_flatten_forward(prev_layer, copy_plain_flattens=True)
    jax.block_until_ready(out2["W_upper2"])
    for nm in names:
        assert bool(jnp.all(out2[nm] == prev_layer[nm].reshape(-1)))
    for nm in _CLONED:
        assert bool(jnp.all(out2[nm + "2"] == out2[nm]))
    assert out2["n_out"] == n

    print("KERNEL_OK")
</pallas_src>

<mosaic_0001>
module attributes {stable_mosaic.version = 11 : i64} {
  func.func @kernel(%arg0: i32, %arg1: memref<8x128xf32, #tpu.memory_space<vmem>>, %arg2: memref<8x128xf32, #tpu.memory_space<vmem>>, %arg3: memref<8x128xf32, #tpu.memory_space<vmem>>, %arg4: memref<8x128xf32, #tpu.memory_space<vmem>>, %arg5: memref<8x128xf32, #tpu.memory_space<vmem>>, %arg6: memref<8x128xf32, #tpu.memory_space<vmem>>, %arg7: memref<8x128xf32, #tpu.memory_space<vmem>>, %arg8: memref<8x128xf32, #tpu.memory_space<vmem>>) attributes {dimension_semantics = [#tpu.dimension_semantics<parallel>], iteration_bounds = array<i64: 1>, scalar_prefetch = 0 : i64, scratch_operands = 0 : i64, tpu.core_type = #tpu.core_type<tc>, window_params = [{transform_indices = @transform_0, window_bounds = array<i64: 8, 128>}, {transform_indices = @transform_1, window_bounds = array<i64: 8, 128>}, {transform_indices = @transform_2, window_bounds = array<i64: 8, 128>}, {transform_indices = @transform_3, window_bounds = array<i64: 8, 128>}, {transform_indices = @transform_4, window_bounds = array<i64: 8, 128>}, {transform_indices = @transform_5, window_bounds = array<i64: 8, 128>}, {transform_indices = @transform_6, window_bounds = array<i64: 8, 128>}, {transform_indices = @transform_7, window_bounds = array<i64: 8, 128>}]} {
    %c0_i32 = arith.constant 0 : i32
    %c8_i32 = arith.constant 8 : i32
    %0 = arith.muli %c0_i32, %c8_i32 : i32
    %1 = tpu.assume_multiple %0, 8 : i32
    %2 = arith.index_cast %1 : i32 to index
    %c0 = arith.constant 0 : index
    %3 = vector.load %arg1[%2, %c0] : memref<8x128xf32, #tpu.memory_space<vmem>>, vector<8x128xf32>
    %4 = arith.index_cast %1 : i32 to index
    %c0_0 = arith.constant 0 : index
    %5 = vector.load %arg5[%4, %c0_0] : memref<8x128xf32, #tpu.memory_space<vmem>>, vector<8x128xf32>
    tpu.vector_store %arg5[%4, %c0_0], %3 {strides = array<i32>} : memref<8x128xf32, #tpu.memory_space<vmem>>, vector<8x128xf32>,
    %6 = arith.index_cast %1 : i32 to index
    %c0_1 = arith.constant 0 : index
    %7 = vector.load %arg2[%6, %c0_1] : memref<8x128xf32, #tpu.memory_space<vmem>>, vector<8x128xf32>
    %8 = arith.index_cast %1 : i32 to index
    %c0_2 = arith.constant 0 : index
    %9 = vector.load %arg6[%8, %c0_2] : memref<8x128xf32, #tpu.memory_space<vmem>>, vector<8x128xf32>
    tpu.vector_store %arg6[%8, %c0_2], %7 {strides = array<i32>} : memref<8x128xf32, #tpu.memory_space<vmem>>, vector<8x128xf32>,
    %10 = arith.index_cast %1 : i32 to index
    %c0_3 = arith.constant 0 : index
    %11 = vector.load %arg3[%10, %c0_3] : memref<8x128xf32, #tpu.memory_space<vmem>>, vector<8x128xf32>
    %12 = arith.index_cast %1 : i32 to index
    %c0_4 = arith.constant 0 : index
    %13 = vector.load %arg7[%12, %c0_4] : memref<8x128xf32, #tpu.memory_space<vmem>>, vector<8x128xf32>
    tpu.vector_store %arg7[%12, %c0_4], %11 {strides = array<i32>} : memref<8x128xf32, #tpu.memory_space<vmem>>, vector<8x128xf32>,
    %14 = arith.index_cast %1 : i32 to index
    %c0_5 = arith.constant 0 : index
    %15 = vector.load %arg4[%14, %c0_5] : memref<8x128xf32, #tpu.memory_space<vmem>>, vector<8x128xf32>
    %16 = arith.index_cast %1 : i32 to index
    %c0_6 = arith.constant 0 : index
    %17 = vector.load %arg8[%16, %c0_6] : memref<8x128xf32, #tpu.memory_space<vmem>>, vector<8x128xf32>
    tpu.vector_store %arg8[%16, %c0_6], %15 {strides = array<i32>} : memref<8x128xf32, #tpu.memory_space<vmem>>, vector<8x128xf32>,
    %c1_i32 = arith.constant 1 : i32
    return
  }
  func.func @transform_0(%arg0: i32) -> (i32, i32) {
    %c0_i32 = arith.constant 0 : i32
    %c0_i32_0 = arith.constant 0 : i32
    return %arg0, %c0_i32 : i32, i32
  }
  func.func @transform_1(%arg0: i32) -> (i32, i32) {
    %c0_i32 = arith.constant 0 : i32
    %c0_i32_0 = arith.constant 0 : i32
    return %arg0, %c0_i32 : i32, i32
  }
  func.func @transform_2(%arg0: i32) -> (i32, i32) {
    %c0_i32 = arith.constant 0 : i32
    %c0_i32_0 = arith.constant 0 : i32
    return %arg0, %c0_i32 : i32, i32
  }
  func.func @transform_3(%arg0: i32) -> (i32, i32) {
    %c0_i32 = arith.constant 0 : i32
    %c0_i32_0 = arith.constant 0 : i32
    return %arg0, %c0_i32 : i32, i32
  }
  func.func @transform_4(%arg0: i32) -> (i32, i32) {
    %c0_i32 = arith.constant 0 : i32
    %c0_i32_0 = arith.constant 0 : i32
    return %arg0, %c0_i32 : i32, i32
  }
  func.func @transform_5(%arg0: i32) -> (i32, i32) {
    %c0_i32 = arith.constant 0 : i32
    %c0_i32_0 = arith.constant 0 : i32
    return %arg0, %c0_i32 : i32, i32
  }
  func.func @transform_6(%arg0: i32) -> (i32, i32) {
    %c0_i32 = arith.constant 0 : i32
    %c0_i32_0 = arith.constant 0 : i32
    return %arg0, %c0_i32 : i32, i32
  }
  func.func @transform_7(%arg0: i32) -> (i32, i32) {
    %c0_i32 = arith.constant 0 : i32
    %c0_i32_0 = arith.constant 0 : i32
    return %arg0, %c0_i32 : i32, i32
  }
}

</mosaic_0001>

<llo_original>
// kernel: tpu_custom_call.1
$region0: #{tpu_custom_call.1}
  #allocation0 [shape = 'u32[]', space=smem, size = 0x4, offset = 0x4, fixed_abs, tag = 'smem constant byte address 0x4 - core index']
  #allocation1 [shape = 'u32[144,128]{1,0:T(1,128)}', space=vmem, size = 0x12000, scoped, tag = 'internal scratch']
  %s0 = inlined_call_operand.hbm [shape: f32[8,128], index: 0, kind: input, shape index: {}]
  %s1 = inlined_call_operand.hbm [shape: f32[8,128], index: 1, kind: input, shape index: {}]
  %s2 = inlined_call_operand.hbm [shape: f32[8,128], index: 2, kind: input, shape index: {}]
  %s3 = inlined_call_operand.hbm [shape: f32[8,128], index: 3, kind: input, shape index: {}]
  %s4 = inlined_call_operand.hbm [shape: f32[8,128], index: 4, kind: output, shape index: {0}]
  %s5 = inlined_call_operand.hbm [shape: f32[8,128], index: 5, kind: output, shape index: {1}]
  %s6 = inlined_call_operand.hbm [shape: f32[8,128], index: 6, kind: output, shape index: {2}]
  %s7 = inlined_call_operand.hbm [shape: f32[8,128], index: 7, kind: output, shape index: {3}]
  %8 = xla_tuple %s4, %s5, %s6, %s7
  %s9 = sld [smem:[#allocation0]]
  $region66: #{tpu_custom_call.1} parent=0
    _
  %s11 = ssub.s32 1, %s9
  %s12 = scalar_select 0, %s11, %s9
  $region1: #{tpu_custom_call.1} parent=0
    #allocation2 [shape = 'u8[4096]{0}', space=vmem, size = 0x1000, scoped, tag = 'input window, operand 0, single buffered']
    #allocation3 [shape = 's32[1]{0}', space=sflag, size = 0x4, scoped, tag = 'scoped memory for tpu_custom_call.1']
    #allocation4 [shape = 's32[1]{0}', space=sflag, size = 0x4, scoped, tag = 'scoped memory for tpu_custom_call.1']
    #allocation5 [shape = 'u8[4096]{0}', space=vmem, size = 0x1000, scoped, tag = 'input window, operand 1, single buffered']
    #allocation6 [shape = 's32[1]{0}', space=sflag, size = 0x4, scoped, tag = 'scoped memory for tpu_custom_call.1']
    #allocation7 [shape = 'u8[4096]{0}', space=vmem, size = 0x1000, scoped, tag = 'input window, operand 2, single buffered']
    #allocation8 [shape = 'u8[4096]{0}', space=vmem, size = 0x1000, scoped, tag = 'input window, operand 3, single buffered']
    #allocation9 [shape = 's32[1]{0}', space=sflag, size = 0x4, scoped, tag = 'scoped memory for tpu_custom_call.1']
    #allocation10 [shape = 'u8[4096]{0}', space=vmem, size = 0x1000, scoped, tag = 'output window, operand 0, single buffered']
    #allocation11 [shape = 'u8[4096]{0}', space=vmem, size = 0x1000, scoped, tag = 'output window, operand 1, single buffered']
    #allocation12 [shape = 's32[1]{0}', space=sflag, size = 0x4, scoped, tag = 'scoped memory for tpu_custom_call.1']
    #allocation13 [shape = 'u8[4096]{0}', space=vmem, size = 0x1000, scoped, tag = 'output window, operand 2, single buffered']
    #allocation14 [shape = 'u8[4096]{0}', space=vmem, size = 0x1000, scoped, tag = 'output window, operand 3, single buffered']
    #allocation15 [shape = 's32[1]{0}', space=sflag, size = 0x4, scoped, tag = 'scoped memory for tpu_custom_call.1']
    %13 = vsyncpa [#allocation3], 0
    %14 = vsyncpa [#allocation6], 0
    %15 = vsyncpa [#allocation9], 0
    %16 = vsyncpa [#allocation4], 0
    %17 = vsyncpa [#allocation12], 0
    %18 = vsyncpa [#allocation15], 0
    // Predicated region
    $region2: #{tpu_custom_call.1} parent=1 // pred_check
      _
    $region3: #{tpu_custom_call.1} parent=1 // pred_check_branch
      %20 = sbr.rel (0) target = $region5
    $region4: #{tpu_custom_call.1} parent=1 // pred_region
      %s22 = ssub.s32 128, 128
      %23 = vsyncadd [#allocation3], %s22
      %s25 = sshll.u32 [#allocation2], 4
      %s26 = int_to_ptr.vmem [resolvable:$true] %s25
      %28 = dma.hbm_to_vmem [thread:$0]  %s0, 128, %s26, [#allocation3]
    $region5: #{tpu_custom_call.1} parent=1 // pred_fallthru
      _
    // Predicated region
    $region6: #{tpu_custom_call.1} parent=1 // pred_check
      _
    $region7: #{tpu_custom_call.1} parent=1 // pred_check_branch
      %30 = sbr.rel (0) target = $region9
    $region8: #{tpu_custom_call.1} parent=1 // pred_region
      %s32 = ssub.s32 128, 128
      %33 = vsyncadd [#allocation6], %s32
      %s35 = sshll.u32 [#allocation5], 4
      %s36 = int_to_ptr.vmem [resolvable:$true] %s35
      %38 = dma.hbm_to_vmem [thread:$0]  %s1, 128, %s36, [#allocation6]
    $region9: #{tpu_custom_call.1} parent=1 // pred_fallthru
      _
    // Predicated region
    $region10: #{tpu_custom_call.1} parent=1 // pred_check
      _
    $region11: #{tpu_custom_call.1} parent=1 // pred_check_branch
      %40 = sbr.rel (0) target = $region13
    $region12: #{tpu_custom_call.1} parent=1 // pred_region
      %s42 = ssub.s32 128, 128
      %43 = vsyncadd [#allocation6], %s42
      %s45 = sshll.u32 [#allocation7], 4
      %s46 = int_to_ptr.vmem [resolvable:$true] %s45
      %48 = dma.hbm_to_vmem [thread:$0]  %s2, 128, %s46, [#allocation6]
    $region13: #{tpu_custom_call.1} parent=1 // pred_fallthru
      _
    // Predicated region
    $region14: #{tpu_custom_call.1} parent=1 // pred_check
      _
    $region15: #{tpu_custom_call.1} parent=1 // pred_check_branch
      %50 = sbr.rel (0) target = $region17
    $region16: #{tpu_custom_call.1} parent=1 // pred_region
      %s52 = ssub.s32 128, 128
      %53 = vsyncadd [#allocation9], %s52
      %s55 = sshll.u32 [#allocation8], 4
      %s56 = int_to_ptr.vmem [resolvable:$true] %s55
      %58 = dma.hbm_to_vmem [thread:$0]  %s3, 128, %s56, [#allocation9]
    $region17: #{tpu_custom_call.1} parent=1 // pred_fallthru
      _
    // Predicated region
    $region18: #{tpu_custom_call.1} parent=1 // pred_check
      _
    $region19: #{tpu_custom_call.1} parent=1 // pred_check_branch
      %60 = sbr.rel (0) target = $region21
    $region20: #{tpu_custom_call.1} parent=1 // pred_region
      %61 = dma.done [#allocation3], 128
    $region21: #{tpu_custom_call.1} parent=1 // pred_fallthru
      _
    // Predicated region
    $region22: #{tpu_custom_call.1} parent=1 // pred_check
      _
    $region23: #{tpu_custom_call.1} parent=1 // pred_check_branch
      %63 = sbr.rel (0) target = $region25
    $region24: #{tpu_custom_call.1} parent=1 // pred_region
      %64 = dma.done [#allocation6], 128
    $region25: #{tpu_custom_call.1} parent=1 // pred_fallthru
      _
    // Predicated region
    $region26: #{tpu_custom_call.1} parent=1 // pred_check
      _
    $region27: #{tpu_custom_call.1} parent=1 // pred_check_branch
      %66 = sbr.rel (0) target = $region29
    $region28: #{tpu_custom_call.1} parent=1 // pred_region
      %67 = dma.done [#allocation6], 128
    $region29: #{tpu_custom_call.1} parent=1 // pred_fallthru
      _
    // Predicated region
    $region30: #{tpu_custom_call.1} parent=1 // pred_check
      _
    $region31: #{tpu_custom_call.1} parent=1 // pred_check_branch
      %69 = sbr.rel (0) target = $region33
    $region32: #{tpu_custom_call.1} parent=1 // pred_region
      %70 = dma.done [#allocation9], 128
    $region33: #{tpu_custom_call.1} parent=1 // pred_fallthru
      _
    %v71 = vld [vmem:[#allocation2] sm:$0xff]
    %72 = vst [vmem:[#allocation10] sm:$0xff] %v71
    %v73 = vld [vmem:[#allocation5] sm:$0xff]
    %74 = vst [vmem:[#allocation11] sm:$0xff] %v73
    %v75 = vld [vmem:[#allocation7] sm:$0xff]
    %76 = vst [vmem:[#allocation13] sm:$0xff] %v75
    %v77 = vld [vmem:[#allocation8] sm:$0xff]
    %78 = vst [vmem:[#allocation14] sm:$0xff] %v77
    // Predicated region
    $region34: #{tpu_custom_call.1} parent=1 // pred_check
      _
    $region35: #{tpu_custom_call.1} parent=1 // pred_check_branch
      %80 = sbr.rel (0) target = $region37
    $region36: #{tpu_custom_call.1} parent=1 // pred_region
      %s82 = ssub.s32 128, 128
      %83 = vsyncadd [#allocation4], %s82
      %s85 = sshll.u32 [#allocation10], 4
      %s86 = int_to_ptr.vmem [resolvable:$true] %s85
      %88 = dma.vmem_to_hbm [thread:$0]  %s86, 128, %s4, [#allocation4]
    $region37: #{tpu_custom_call.1} parent=1 // pred_fallthru
      _
    // Predicated region
    $region38: #{tpu_custom_call.1} parent=1 // pred_check
      _
    $region39: #{tpu_custom_call.1} parent=1 // pred_check_branch
      %90 = sbr.rel (0) target = $region41
    $region40: #{tpu_custom_call.1} parent=1 // pred_region
      %s92 = ssub.s32 128, 128
      %93 = vsyncadd [#allocation12], %s92
      %s95 = sshll.u32 [#allocation11], 4
      %s96 = int_to_ptr.vmem [resolvable:$true] %s95
      %98 = dma.vmem_to_hbm [thread:$0]  %s96, 128, %s5, [#allocation12]
    $region41: #{tpu_custom_call.1} parent=1 // pred_fallthru
      _
    // Predicated region
    $region42: #{tpu_custom_call.1} parent=1 // pred_check
      _
    $region43: #{tpu_custom_call.1} parent=1 // pred_check_branch
      %100 = sbr.rel (0) target = $region45
    $region44: #{tpu_custom_call.1} parent=1 // pred_region
      %s102 = ssub.s32 128, 128
      %103 = vsyncadd [#allocation12], %s102
      %s105 = sshll.u32 [#allocation13], 4
      %s106 = int_to_ptr.vmem [resolvable:$true] %s105
      %108 = dma.vmem_to_hbm [thread:$0]  %s106, 128, %s6, [#allocation12]
    $region45: #{tpu_custom_call.1} parent=1 // pred_fallthru
      _
    // Predicated region
    $region46: #{tpu_custom_call.1} parent=1 // pred_check
      _
    $region47: #{tpu_custom_call.1} parent=1 // pred_check_branch
      %110 = sbr.rel (0) target = $region49
    $region48: #{tpu_custom_call.1} parent=1 // pred_region
      %s112 = ssub.s32 128, 128
      %113 = vsyncadd [#allocation15], %s112
      %s115 = sshll.u32 [#allocation14], 4
      %s116 = int_to_ptr.vmem [resolvable:$true] %s115
      %118 = dma.vmem_to_hbm [thread:$0]  %s116, 128, %s7, [#allocation15]
    $region49: #{tpu_custom_call.1} parent=1 // pred_fallthru
      _
    // Predicated region
    $region50: #{tpu_custom_call.1} parent=1 // pred_check
      _
    $region51: #{tpu_custom_call.1} parent=1 // pred_check_branch
      %120 = sbr.rel (0) target = $region53
    $region52: #{tpu_custom_call.1} parent=1 // pred_region
      %121 = dma.done [#allocation4], 128
    $region53: #{tpu_custom_call.1} parent=1 // pred_fallthru
      _
    // Predicated region
    $region54: #{tpu_custom_call.1} parent=1 // pred_check
      _
    $region55: #{tpu_custom_call.1} parent=1 // pred_check_branch
      %123 = sbr.rel (0) target = $region57
    $region56: #{tpu_custom_call.1} parent=1 // pred_region
      %124 = dma.done [#allocation12], 128
    $region57: #{tpu_custom_call.1} parent=1 // pred_fallthru
      _
    // Predicated region
    $region58: #{tpu_custom_call.1} parent=1 // pred_check
      _
    $region59: #{tpu_custom_call.1} parent=1 // pred_check_branch
      %126 = sbr.rel (0) target = $region61
    $region60: #{tpu_custom_call.1} parent=1 // pred_region
      %127 = dma.done [#allocation12], 128
    $region61: #{tpu_custom_call.1} parent=1 // pred_fallthru
      _
    // Predicated region
    $region62: #{tpu_custom_call.1} parent=1 // pred_check
      _
    $region63: #{tpu_custom_call.1} parent=1 // pred_check_branch
      %129 = sbr.rel (0) target = $region65
    $region64: #{tpu_custom_call.1} parent=1 // pred_region
      %130 = dma.done [#allocation15], 128
    $region65: #{tpu_custom_call.1} parent=1 // pred_fallthru
      _
    %131 = vsyncpa [#allocation3], 1
    %132 = vsyncpa [#allocation6], 1
    %133 = vsyncpa [#allocation9], 1
    %134 = vsyncpa [#allocation4], 1
    %135 = vsyncpa [#allocation12], 1
    %136 = vsyncpa [#allocation15], 1

</llo_original>
